<compile_context>
chip_gen: v7x
topology: tpu7x:2x2x1
jax: 0.10.0
libtpu: 0.0.40
codegen_flags: <defaults>
</compile_context>

<pallas_src>
import functools
from typing import NamedTuple

import jax
import jax.numpy as jnp
from jax.experimental import pallas as pl
from jax.experimental.pallas import tpu as pltpu


def _round_up(x, m):
    return -(-x // m) * m


class PackedLSTMParams(NamedTuple):
    w_packed: jax.Array   # (D_total, num_tiles * 4 * tile_h), weight_dtype
    b_packed: jax.Array   # (1, num_tiles * 4 * tile_h), float32 (b_ih + b_hh)
    input_size: int       # un-padded fused input feature count (attn_ctx + y)
    hidden_size: int      # un-padded H
    d_pad: int            # padded input feature count (multiple of 128)
    h_pad: int            # padded hidden size (multiple of 128)
    tile_h: int           # hidden tile width (multiple of 128, divides h_pad)


def _pick_tile_h(d_total, h_pad, weight_bytes, budget=8 * 1024 * 1024):
    """Largest 128-multiple divisor of h_pad keeping one weight tile <= budget bytes."""
    best = 128
    for cand in range(h_pad, 127, -128):
        if h_pad % cand == 0 and d_total * 4 * cand * weight_bytes <= budget:
            best = cand
            break
    return best


def prepare_updater_lstm_params(params, *, weight_dtype=jnp.bfloat16, tile_h=None):
    """One-time packing of torch.nn.LSTMCell params (w_ih, w_hh, b_ih, b_hh).

    Do this once at model-setup time, NOT per timestep.
    """
    w_ih, w_hh, b_ih, b_hh = params
    four_h, d_in = w_ih.shape
    H = four_h // 4
    assert w_hh.shape == (4 * H, H)
    assert b_ih.shape == (4 * H,) and b_hh.shape == (4 * H,)

    d_pad = max(128, _round_up(d_in, 128))
    h_pad = max(128, _round_up(H, 128))
    d_total = d_pad + h_pad

    wbytes = jnp.dtype(weight_dtype).itemsize
    if tile_h is None:
        tile_h = _pick_tile_h(d_total, h_pad, wbytes)
    assert tile_h % 128 == 0 and h_pad % tile_h == 0
    num_tiles = h_pad // tile_h

    # Stacked fused weight: rows [0:d_in] take x, rows [d_pad:d_pad+H] take h.
    # Shape (D_total, 4, H_pad), gate order (i, f, g, o).
    w_full = jnp.zeros((d_total, 4, h_pad), jnp.float32)
    w_ih_t = w_ih.T.astype(jnp.float32).reshape(d_in, 4, H)
    w_hh_t = w_hh.T.astype(jnp.float32).reshape(H, 4, H)
    w_full = w_full.at[:d_in, :, :H].set(w_ih_t)
    w_full = w_full.at[d_pad:d_pad + H, :, :H].set(w_hh_t)

    # Reorder to per-H-tile gate blocks: tile j occupies columns
    # [j*4*tile_h : (j+1)*4*tile_h] = [i_j | f_j | g_j | o_j], each 128-lane aligned.
    w_packed = (w_full.reshape(d_total, 4, num_tiles, tile_h)
                      .transpose(0, 2, 1, 3)
                      .reshape(d_total, num_tiles * 4 * tile_h)
                      .astype(weight_dtype))

    bias = jnp.zeros((4, h_pad), jnp.float32)
    bias = bias.at[:, :H].set((b_ih + b_hh).astype(jnp.float32).reshape(4, H))
    b_packed = (bias.reshape(4, num_tiles, tile_h)
                    .transpose(1, 0, 2)
                    .reshape(1, num_tiles * 4 * tile_h))

    return PackedLSTMParams(w_packed, b_packed, d_in, H, d_pad, h_pad, tile_h)


def _lstm_cell_kernel(xh_ref, c_ref, w_ref, b_ref, h_out_ref, c_out_ref, *, tile_h):
    """One H-tile of one LSTMCell step. One fused MXU matmul, lane-aligned gates."""
    xh = xh_ref[...]                                # (B_pad, D_total)  f32
    w = w_ref[...].astype(jnp.float32)              # (D_total, 4*tile_h)  bf16 -> f32
    gates = jnp.dot(xh, w, preferred_element_type=jnp.float32) + b_ref[...]

    T = tile_h
    i_g = jax.nn.sigmoid(gates[:, 0 * T:1 * T])
    f_g = jax.nn.sigmoid(gates[:, 1 * T:2 * T])
    g_g = jnp.tanh(gates[:, 2 * T:3 * T])
    o_g = jax.nn.sigmoid(gates[:, 3 * T:4 * T])

    c_new = f_g * c_ref[...] + i_g * g_g
    h_out_ref[...] = (o_g * jnp.tanh(c_new)).astype(h_out_ref.dtype)
    c_out_ref[...] = c_new.astype(c_out_ref.dtype)


def updater_lstm_forward(y, hidden_cell, packed: PackedLSTMParams, attn_context=None):
    """UpdaterLSTM forward.

    y:            (B, output_size)
    hidden_cell:  (h, c), each (B, hidden_size)
    packed:       PackedLSTMParams from prepare_updater_lstm_params
    attn_context: optional (B, D_ctx), concatenated in front of y (as in the PyTorch module)
    Returns (h_new, c_new), each (B, hidden_size).
    """
    h0, c0 = hidden_cell
    yc = y if attn_context is None else jnp.concatenate([attn_context, y], axis=1)

    B, d_in = yc.shape
    H = packed.hidden_size
    assert d_in == packed.input_size, "input feature dim mismatch with packed LSTMCell weights"
    assert h0.shape == (B, H) and c0.shape == (B, H)

    d_pad, h_pad, tile_h = packed.d_pad, packed.h_pad, packed.tile_h
    d_total = d_pad + h_pad
    num_tiles = h_pad // tile_h
    b_pad = max(8, _round_up(B, 8))
    f32 = jnp.float32

    # Fused activation [x | h]; each segment starts on a 128-lane boundary.
    xh = jnp.zeros((b_pad, d_total), f32)
    xh = xh.at[:B, :d_in].set(yc.astype(f32))
    xh = xh.at[:B, d_pad:d_pad + H].set(h0.astype(f32))
    c_p = jnp.zeros((b_pad, h_pad), f32).at[:B, :H].set(c0.astype(f32))

    kernel = functools.partial(_lstm_cell_kernel, tile_h=tile_h)

    # VMEM budget: double-buffered blocks + headroom (tile picker keeps weight tiles small).
    wbytes = packed.w_packed.dtype.itemsize
    block_bytes = (b_pad * d_total * 4              # xh (VMEM-resident, constant index_map)
                   + b_pad * tile_h * 4             # c tile
                   + d_total * 4 * tile_h * wbytes  # weight tile
                   + 4 * tile_h * 4                 # bias tile
                   + 2 * b_pad * tile_h * 4)        # h/c output tiles
    vmem_limit = int(min(max(2 * block_bytes + (4 << 20), 16 << 20), 64 << 20))

    h_new_p, c_new_p = pl.pallas_call(
        kernel,
        out_shape=(
            jax.ShapeDtypeStruct((b_pad, h_pad), f32),
            jax.ShapeDtypeStruct((b_pad, h_pad), f32),
        ),
        grid=(num_tiles,),
        in_specs=[
            pl.BlockSpec((b_pad, d_total), lambda j: (0, 0)),      # [x | h]
            pl.BlockSpec((b_pad, tile_h), lambda j: (0, j)),       # c tile
            pl.BlockSpec((d_total, 4 * tile_h), lambda j: (0, j)),  # weight tile (bf16)
            pl.BlockSpec((1, 4 * tile_h), lambda j: (0, j)),        # bias tile
        ],
        out_specs=(
            pl.BlockSpec((b_pad, tile_h), lambda j: (0, j)),
            pl.BlockSpec((b_pad, tile_h), lambda j: (0, j)),
        ),
        compiler_params=pltpu.CompilerParams(
            dimension_semantics=("parallel",),       # H-tiles are independent (megacore on v7x)
            vmem_limit_bytes=vmem_limit,
        ),
    )(xh, c_p, packed.w_packed, packed.b_packed)

    return h_new_p[:B, :H], c_new_p[:B, :H]


def init_updater_lstm_params(key, hidden_size, input_size):
    """Deterministic LSTMCell parameter init (uniform(-k, k), k = 1/sqrt(hidden))."""
    k = 1.0 / jnp.sqrt(jnp.float32(hidden_size))
    k1, k2, k3, k4 = jax.random.split(key, 4)
    w_ih = jax.random.uniform(k1, (4 * hidden_size, input_size), jnp.float32, -k, k)
    w_hh = jax.random.uniform(k2, (4 * hidden_size, hidden_size), jnp.float32, -k, k)
    b_ih = jax.random.uniform(k3, (4 * hidden_size,), jnp.float32, -k, k)
    b_hh = jax.random.uniform(k4, (4 * hidden_size,), jnp.float32, -k, k)
    return w_ih, w_hh, b_ih, b_hh


def _reference_lstm_cell(y, hidden_cell, params):
    """Pure-JAX reference matching torch.nn.LSTMCell semantics."""
    h, c = hidden_cell
    w_ih, w_hh, b_ih, b_hh = params
    gates = y @ w_ih.T + b_ih + h @ w_hh.T + b_hh
    H = h.shape[1]
    i = jax.nn.sigmoid(gates[:, 0 * H:1 * H])
    f = jax.nn.sigmoid(gates[:, 1 * H:2 * H])
    g = jnp.tanh(gates[:, 2 * H:3 * H])
    o = jax.nn.sigmoid(gates[:, 3 * H:4 * H])
    c_new = f * c + i * g
    h_new = o * jnp.tanh(c_new)
    return h_new, c_new


if __name__ == "__main__":
    hidden_size = 32
    output_size = 1
    batch = 2

    key = jax.random.PRNGKey(0)
    k_y, k_h, k_c, k_p = jax.random.split(key, 4)

    y = jax.random.normal(k_y, (batch, output_size), jnp.float32)
    h0 = jax.random.normal(k_h, (batch, hidden_size), jnp.float32)
    c0 = jax.random.normal(k_c, (batch, hidden_size), jnp.float32)
    params = init_updater_lstm_params(k_p, hidden_size, output_size)

    # --- default path: bf16 weight storage, f32 math -------------------------------
    packed_bf16 = prepare_updater_lstm_params(params, weight_dtype=jnp.bfloat16)
    h_new, c_new = updater_lstm_forward(y, (h0, c0), packed_bf16, attn_context=None)
    jax.block_until_ready((h_new, c_new))

    # Reference with the same bf16-rounded weights (isolates kernel correctness from
    # the deliberate weight quantization).
    w_ih, w_hh, b_ih, b_hh = params
    params_q = (w_ih.astype(jnp.bfloat16).astype(jnp.float32),
                w_hh.astype(jnp.bfloat16).astype(jnp.float32), b_ih, b_hh)
    h_ref_q, c_ref_q = _reference_lstm_cell(y, (h0, c0), params_q)
    assert jnp.allclose(h_new, h_ref_q, atol=1e-4, rtol=1e-4)
    assert jnp.allclose(c_new, c_ref_q, atol=1e-4, rtol=1e-4)

    # --- full-f32 weight path: exact match to the f32 reference --------------------
    packed_f32 = prepare_updater_lstm_params(params, weight_dtype=jnp.float32)
    h_new32, c_new32 = updater_lstm_forward(y, (h0, c0), packed_f32, attn_context=None)
    jax.block_until_ready((h_new32, c_new32))
    h_ref, c_ref = _reference_lstm_cell(y, (h0, c0), params)
    assert jnp.allclose(h_new32, h_ref, atol=1e-5, rtol=1e-5)
    assert jnp.allclose(c_new32, c_ref, atol=1e-5, rtol=1e-5)

    print("KERNEL_OK")
</pallas_src>

<mosaic_0001>
module attributes {stable_mosaic.version = 11 : i64} {
  func.func @_lstm_cell_kernel(%arg0: i32, %arg1: memref<8x256xf32, #tpu.memory_space<vmem>>, %arg2: memref<8x128xf32, #tpu.memory_space<vmem>>, %arg3: memref<256x512xbf16, #tpu.memory_space<vmem>>, %arg4: memref<1x512xf32, #tpu.memory_space<vmem>>, %arg5: memref<8x128xf32, #tpu.memory_space<vmem>>, %arg6: memref<8x128xf32, #tpu.memory_space<vmem>>) attributes {dimension_semantics = [#tpu.dimension_semantics<parallel>], iteration_bounds = array<i64: 1>, scalar_prefetch = 0 : i64, scratch_operands = 0 : i64, tpu.core_type = #tpu.core_type<tc>, window_params = [{pipeline_mode = #tpu.pipeline_mode<synchronous>, transform_indices = @transform_0, window_bounds = array<i64: 8, 256>}, {transform_indices = @transform_1, window_bounds = array<i64: 8, 128>}, {transform_indices = @transform_2, window_bounds = array<i64: 256, 512>}, {transform_indices = @transform_3, window_bounds = array<i64: 1, 512>}, {transform_indices = @transform_4, window_bounds = array<i64: 8, 128>}, {transform_indices = @transform_5, window_bounds = array<i64: 8, 128>}]} {
    %c0 = arith.constant 0 : index
    %c0_0 = arith.constant 0 : index
    %0 = vector.load %arg1[%c0, %c0_0] : memref<8x256xf32, #tpu.memory_space<vmem>>, vector<8x256xf32>
    %c0_1 = arith.constant 0 : index
    %c0_2 = arith.constant 0 : index
    %1 = vector.load %arg3[%c0_1, %c0_2] : memref<256x512xbf16, #tpu.memory_space<vmem>>, vector<256x512xbf16>
    %2 = arith.extf %1 : vector<256x512xbf16> to vector<256x512xf32>
    %cst = arith.constant dense<0.000000e+00> : vector<8x512xf32>
    %3 = tpu.matmul %0, %2, %cst {dimension_numbers = #tpu.dot_dimension_numbers<[1], [0], [0], [1], [0, 0, 1, 1], [], []>} : vector<8x256xf32>, vector<256x512xf32>, vector<8x512xf32> -> vector<8x512xf32>
    %c0_3 = arith.constant 0 : index
    %c0_4 = arith.constant 0 : index
    %4 = vector.load %arg4[%c0_3, %c0_4] : memref<1x512xf32, #tpu.memory_space<vmem>>, vector<1x512xf32>
    %5 = vector.broadcast %4 : vector<1x512xf32> to vector<8x512xf32>
    %6 = arith.addf %3, %5 : vector<8x512xf32>
    %7 = vector.extract_strided_slice %6 {offsets = [0, 0], sizes = [8, 128], strides = [1, 1]} : vector<8x512xf32> to vector<8x128xf32>
    %8 = arith.negf %7 : vector<8x128xf32>
    %9 = math.exp %8 : vector<8x128xf32>
    %cst_5 = arith.constant 1.000000e+00 : f32
    %10 = vector.broadcast %cst_5 : f32 to vector<8x128xf32>
    %11 = arith.addf %10, %9 : vector<8x128xf32>
    %12 = arith.divf %10, %11 : vector<8x128xf32>
    %13 = vector.extract_strided_slice %6 {offsets = [0, 128], sizes = [8, 128], strides = [1, 1]} : vector<8x512xf32> to vector<8x128xf32>
    %14 = arith.negf %13 : vector<8x128xf32>
    %15 = math.exp %14 : vector<8x128xf32>
    %cst_6 = arith.constant 1.000000e+00 : f32
    %16 = vector.broadcast %cst_6 : f32 to vector<8x128xf32>
    %17 = arith.addf %16, %15 : vector<8x128xf32>
    %18 = arith.divf %16, %17 : vector<8x128xf32>
    %19 = vector.extract_strided_slice %6 {offsets = [0, 256], sizes = [8, 128], strides = [1, 1]} : vector<8x512xf32> to vector<8x128xf32>
    %20 = math.tanh %19 : vector<8x128xf32>
    %21 = vector.extract_strided_slice %6 {offsets = [0, 384], sizes = [8, 128], strides = [1, 1]} : vector<8x512xf32> to vector<8x128xf32>
    %22 = arith.negf %21 : vector<8x128xf32>
    %23 = math.exp %22 : vector<8x128xf32>
    %cst_7 = arith.constant 1.000000e+00 : f32
    %24 = vector.broadcast %cst_7 : f32 to vector<8x128xf32>
    %25 = arith.addf %24, %23 : vector<8x128xf32>
    %26 = arith.divf %24, %25 : vector<8x128xf32>
    %c0_8 = arith.constant 0 : index
    %c0_9 = arith.constant 0 : index
    %27 = vector.load %arg2[%c0_8, %c0_9] : memref<8x128xf32, #tpu.memory_space<vmem>>, vector<8x128xf32>
    %28 = arith.mulf %18, %27 : vector<8x128xf32>
    %29 = arith.mulf %12, %20 : vector<8x128xf32>
    %30 = arith.addf %28, %29 : vector<8x128xf32>
    %31 = math.tanh %30 : vector<8x128xf32>
    %32 = arith.mulf %26, %31 : vector<8x128xf32>
    %c0_10 = arith.constant 0 : index
    %c0_11 = arith.constant 0 : index
    %33 = vector.load %arg5[%c0_10, %c0_11] : memref<8x128xf32, #tpu.memory_space<vmem>>, vector<8x128xf32>
    tpu.vector_store %arg5[%c0_10, %c0_11], %32 {strides = array<i32>} : memref<8x128xf32, #tpu.memory_space<vmem>>, vector<8x128xf32>,
    %c0_12 = arith.constant 0 : index
    %c0_13 = arith.constant 0 : index
    %34 = vector.load %arg6[%c0_12, %c0_13] : memref<8x128xf32, #tpu.memory_space<vmem>>, vector<8x128xf32>
    tpu.vector_store %arg6[%c0_12, %c0_13], %30 {strides = array<i32>} : memref<8x128xf32, #tpu.memory_space<vmem>>, vector<8x128xf32>,
    return
  }
  func.func @transform_0(%arg0: i32) -> (i32, i32) {
    %c0_i32 = arith.constant 0 : i32
    %c0_i32_0 = arith.constant 0 : i32
    %c0_i32_1 = arith.constant 0 : i32
    return %c0_i32, %c0_i32_0 : i32, i32
  }
  func.func @transform_1(%arg0: i32) -> (i32, i32) {
    %c0_i32 = arith.constant 0 : i32
    %c0_i32_0 = arith.constant 0 : i32
    return %c0_i32, %arg0 : i32, i32
  }
  func.func @transform_2(%arg0: i32) -> (i32, i32) {
    %c0_i32 = arith.constant 0 : i32
    %c0_i32_0 = arith.constant 0 : i32
    return %c0_i32, %arg0 : i32, i32
  }
  func.func @transform_3(%arg0: i32) -> (i32, i32) {
    %c0_i32 = arith.constant 0 : i32
    %c0_i32_0 = arith.constant 0 : i32
    return %c0_i32, %arg0 : i32, i32
  }
  func.func @transform_4(%arg0: i32) -> (i32, i32) {
    %c0_i32 = arith.constant 0 : i32
    %c0_i32_0 = arith.constant 0 : i32
    return %c0_i32, %arg0 : i32, i32
  }
  func.func @transform_5(%arg0: i32) -> (i32, i32) {
    %c0_i32 = arith.constant 0 : i32
    %c0_i32_0 = arith.constant 0 : i32
    return %c0_i32, %arg0 : i32, i32
  }
}

</mosaic_0001>

<llo_original>
// kernel: tpu_custom_call.1
$region0: #{tpu_custom_call.1}
  #allocation0 [shape = 'u32[]', space=smem, size = 0x4, offset = 0x4, fixed_abs, tag = 'smem constant byte address 0x4 - core index']
  #allocation1 [shape = 'u32[144,128]{1,0:T(1,128)}', space=vmem, size = 0x12000, scoped, tag = 'internal scratch']
  %s0 = inlined_call_operand.hbm [shape: f32[8,256], index: 0, kind: input, shape index: {}]
  %s1 = inlined_call_operand.hbm [shape: f32[8,128], index: 1, kind: input, shape index: {}]
  %s2 = inlined_call_operand.hbm [shape: bf16[256,512], index: 2, kind: input, shape index: {}]
  %s3 = inlined_call_operand.vmem [shape: f32[1,512], index: 3, kind: input, shape index: {}]
  %s4 = inlined_call_operand.hbm [shape: f32[8,128], index: 4, kind: output, shape index: {0}]
  %s5 = inlined_call_operand.hbm [shape: f32[8,128], index: 5, kind: output, shape index: {1}]
  %6 = xla_tuple %s4, %s5
  %s7 = sld [smem:[#allocation0]]
  $region46: #{tpu_custom_call.1} parent=0
    _
  %s9 = ssub.s32 1, %s7
  %s10 = scalar_select 0, %s9, %s7
  $region1: #{tpu_custom_call.1} parent=0
    #allocation2 [shape = 'u8[8192]{0}', space=vmem, size = 0x2000, scoped, tag = 'input window, operand 0, single buffered']
    #allocation3 [shape = 's32[1]{0}', space=sflag, size = 0x4, scoped, tag = 'scoped memory for tpu_custom_call.1']
    #allocation4 [shape = 's32[1]{0}', space=sflag, size = 0x4, scoped, tag = 'scoped memory for tpu_custom_call.1']
    #allocation5 [shape = 'u8[4096]{0}', space=vmem, size = 0x1000, scoped, tag = 'input window, operand 1, single buffered']
    #allocation6 [shape = 's32[1]{0}', space=sflag, size = 0x4, scoped, tag = 'scoped memory for tpu_custom_call.1']
    #allocation7 [shape = 'u8[262144]{0}', space=vmem, size = 0x40000, scoped, tag = 'input window, operand 2, single buffered']
    #allocation8 [shape = 'u8[4096]{0}', space=vmem, size = 0x1000, scoped, tag = 'output window, operand 0, single buffered']
    #allocation9 [shape = 'u8[4096]{0}', space=vmem, size = 0x1000, scoped, tag = 'output window, operand 1, single buffered']
    #allocation10 [shape = 's32[1]{0}', space=sflag, size = 0x4, scoped, tag = 'scoped memory for tpu_custom_call.1']
    %11 = vsyncpa [#allocation3], 0
    %12 = vsyncpa [#allocation6], 0
    %13 = vsyncpa [#allocation4], 0
    %14 = vsyncpa [#allocation10], 0
    // Predicated region
    $region2: #{tpu_custom_call.1} parent=1 // pred_check
      _
    $region3: #{tpu_custom_call.1} parent=1 // pred_check_branch
      %16 = sbr.rel (0) target = $region5
    $region4: #{tpu_custom_call.1} parent=1 // pred_region
      %s18 = ssub.s32 256, 256
      %19 = vsyncadd [#allocation3], %s18
      %s21 = sshll.u32 [#allocation2], 4
      %s22 = int_to_ptr.vmem [resolvable:$true] %s21
      %24 = dma.hbm_to_vmem [thread:$0]  %s0, 256, %s22, [#allocation3]
    $region5: #{tpu_custom_call.1} parent=1 // pred_fallthru
      _
    // Predicated region
    $region6: #{tpu_custom_call.1} parent=1 // pred_check
      _
    $region7: #{tpu_custom_call.1} parent=1 // pred_check_branch
      %26 = sbr.rel (0) target = $region9
    $region8: #{tpu_custom_call.1} parent=1 // pred_region
      %s28 = ssub.s32 128, 128
      %29 = vsyncadd [#allocation6], %s28
      %s31 = sshll.u32 [#allocation5], 4
      %s32 = int_to_ptr.vmem [resolvable:$true] %s31
      %34 = dma.hbm_to_vmem [thread:$0]  %s1, 128, %s32, [#allocation6]
    $region9: #{tpu_custom_call.1} parent=1 // pred_fallthru
      _
    // Predicated region
    $region10: #{tpu_custom_call.1} parent=1 // pred_check
      _
    $region11: #{tpu_custom_call.1} parent=1 // pred_check_branch
      %36 = sbr.rel (0) target = $region13
    $region12: #{tpu_custom_call.1} parent=1 // pred_region
      %s38 = ssub.s32 8192, 8192
      %39 = vsyncadd [#allocation6], %s38
      %s40 = sshll.u32 [#allocation7], 4
      %s41 = int_to_ptr.vmem [resolvable:$true] %s40
      %46 = dma.hbm_to_vmem [thread:$0]  %s2, 8192, %s41, [#allocation6], 256, 256, 16
    $region13: #{tpu_custom_call.1} parent=1 // pred_fallthru
      _
    // Predicated region
    $region14: #{tpu_custom_call.1} parent=1 // pred_check
      _
    $region15: #{tpu_custom_call.1} parent=1 // pred_check_branch
      %48 = sbr.rel (0) target = $region17
    $region16: #{tpu_custom_call.1} parent=1 // pred_region
      _
    $region17: #{tpu_custom_call.1} parent=1 // pred_fallthru
      _
    // Predicated region
    $region18: #{tpu_custom_call.1} parent=1 // pred_check
      _
    $region19: #{tpu_custom_call.1} parent=1 // pred_check_branch
      %50 = sbr.rel (0) target = $region21
    $region20: #{tpu_custom_call.1} parent=1 // pred_region
      %51 = dma.done [#allocation3], 256
    $region21: #{tpu_custom_call.1} parent=1 // pred_fallthru
      _
    // Predicated region
    $region22: #{tpu_custom_call.1} parent=1 // pred_check
      _
    $region23: #{tpu_custom_call.1} parent=1 // pred_check_branch
      %53 = sbr.rel (0) target = $region25
    $region24: #{tpu_custom_call.1} parent=1 // pred_region
      %54 = dma.done [#allocation6], 128
    $region25: #{tpu_custom_call.1} parent=1 // pred_fallthru
      _
    // Predicated region
    $region26: #{tpu_custom_call.1} parent=1 // pred_check
      _
    $region27: #{tpu_custom_call.1} parent=1 // pred_check_branch
      %56 = sbr.rel (0) target = $region29
    $region28: #{tpu_custom_call.1} parent=1 // pred_region
      %57 = dma.done [#allocation6], 8192
    $region29: #{tpu_custom_call.1} parent=1 // pred_fallthru
      _
    %v58 = vld [vmem:[#allocation2] sm:$0xff]
    %v59 = vld [vmem:[#allocation2 + $0x8] sm:$0xff]
    %v60 = vld [vmem:[#allocation7] sm:$0xff]
    %v61 = vld [vmem:[#allocation7 + $0x8] sm:$0xff]
    %v62 = vld [vmem:[#allocation7 + $0x10] sm:$0xff]
    %v63 = vld [vmem:[#allocation7 + $0x18] sm:$0xff]
    %v64 = vld [vmem:[#allocation7 + $0x20] sm:$0xff]
    %v65 = vld [vmem:[#allocation7 + $0x28] sm:$0xff]
    %v66 = vld [vmem:[#allocation7 + $0x30] sm:$0xff]
    %v67 = vld [vmem:[#allocation7 + $0x38] sm:$0xff]
    %v68 = vld [vmem:[#allocation7 + $0x40] sm:$0xff]
    %v69 = vld [vmem:[#allocation7 + $0x48] sm:$0xff]
    %v70 = vld [vmem:[#allocation7 + $0x50] sm:$0xff]
    %v71 = vld [vmem:[#allocation7 + $0x58] sm:$0xff]
    %v72 = vld [vmem:[#allocation7 + $0x60] sm:$0xff]
    %v73 = vld [vmem:[#allocation7 + $0x68] sm:$0xff]
    %v74 = vld [vmem:[#allocation7 + $0x70] sm:$0xff]
    %v75 = vld [vmem:[#allocation7 + $0x78] sm:$0xff]
    %v76 = vld [vmem:[#allocation7 + $0x80] sm:$0xff]
    %v77 = vld [vmem:[#allocation7 + $0x88] sm:$0xff]
    %v78 = vld [vmem:[#allocation7 + $0x90] sm:$0xff]
    %v79 = vld [vmem:[#allocation7 + $0x98] sm:$0xff]
    %v80 = vld [vmem:[#allocation7 + $0xa0] sm:$0xff]
    %v81 = vld [vmem:[#allocation7 + $0xa8] sm:$0xff]
    %v82 = vld [vmem:[#allocation7 + $0xb0] sm:$0xff]
    %v83 = vld [vmem:[#allocation7 + $0xb8] sm:$0xff]
    %v84 = vld [vmem:[#allocation7 + $0xc0] sm:$0xff]
    %v85 = vld [vmem:[#allocation7 + $0xc8] sm:$0xff]
    %v86 = vld [vmem:[#allocation7 + $0xd0] sm:$0xff]
    %v87 = vld [vmem:[#allocation7 + $0xd8] sm:$0xff]
    %v88 = vld [vmem:[#allocation7 + $0xe0] sm:$0xff]
    %v89 = vld [vmem:[#allocation7 + $0xe8] sm:$0xff]
    %v90 = vld [vmem:[#allocation7 + $0xf0] sm:$0xff]
    %v91 = vld [vmem:[#allocation7 + $0xf8] sm:$0xff]
    %v92 = vld [vmem:[#allocation7 + $0x100] sm:$0xff]
    %v93 = vld [vmem:[#allocation7 + $0x108] sm:$0xff]
    %v94 = vld [vmem:[#allocation7 + $0x110] sm:$0xff]
    %v95 = vld [vmem:[#allocation7 + $0x118] sm:$0xff]
    %v96 = vld [vmem:[#allocation7 + $0x120] sm:$0xff]
    %v97 = vld [vmem:[#allocation7 + $0x128] sm:$0xff]
    %v98 = vld [vmem:[#allocation7 + $0x130] sm:$0xff]
    %v99 = vld [vmem:[#allocation7 + $0x138] sm:$0xff]
    %v100 = vld [vmem:[#allocation7 + $0x140] sm:$0xff]
    %v101 = vld [vmem:[#allocation7 + $0x148] sm:$0xff]
    %v102 = vld [vmem:[#allocation7 + $0x150] sm:$0xff]
    %v103 = vld [vmem:[#allocation7 + $0x158] sm:$0xff]
    %v104 = vld [vmem:[#allocation7 + $0x160] sm:$0xff]
    %v105 = vld [vmem:[#allocation7 + $0x168] sm:$0xff]
    %v106 = vld [vmem:[#allocation7 + $0x170] sm:$0xff]
    %v107 = vld [vmem:[#allocation7 + $0x178] sm:$0xff]
    %v108 = vld [vmem:[#allocation7 + $0x180] sm:$0xff]
    %v109 = vld [vmem:[#allocation7 + $0x188] sm:$0xff]
    %v110 = vld [vmem:[#allocation7 + $0x190] sm:$0xff]
    %v111 = vld [vmem:[#allocation7 + $0x198] sm:$0xff]
    %v112 = vld [vmem:[#allocation7 + $0x1a0] sm:$0xff]
    %v113 = vld [vmem:[#allocation7 + $0x1a8] sm:$0xff]
    %v114 = vld [vmem:[#allocation7 + $0x1b0] sm:$0xff]
    %v115 = vld [vmem:[#allocation7 + $0x1b8] sm:$0xff]
    %v116 = vld [vmem:[#allocation7 + $0x1c0] sm:$0xff]
    %v117 = vld [vmem:[#allocation7 + $0x1c8] sm:$0xff]
    %v118 = vld [vmem:[#allocation7 + $0x1d0] sm:$0xff]
    %v119 = vld [vmem:[#allocation7 + $0x1d8] sm:$0xff]
    %v120 = vld [vmem:[#allocation7 + $0x1e0] sm:$0xff]
    %v121 = vld [vmem:[#allocation7 + $0x1e8] sm:$0xff]
    %v122 = vld [vmem:[#allocation7 + $0x1f0] sm:$0xff]
    %v123 = vld [vmem:[#allocation7 + $0x1f8] sm:$0xff]
    %v124 = vunpack.c.l.bf16 %v60
    %v125 = vunpack.c.h.bf16 %v60
    %v126 = vunpack.c.l.bf16 %v61
    %v127 = vunpack.c.h.bf16 %v61
    %v128 = vunpack.c.l.bf16 %v62
    %v129 = vunpack.c.h.bf16 %v62
    %v130 = vunpack.c.l.bf16 %v63
    %v131 = vunpack.c.h.bf16 %v63
    %v132 = vunpack.c.l.bf16 %v64
    %v133 = vunpack.c.h.bf16 %v64
    %v134 = vunpack.c.l.bf16 %v65
    %v135 = vunpack.c.h.bf16 %v65
    %v136 = vunpack.c.l.bf16 %v66
    %v137 = vunpack.c.h.bf16 %v66
    %v138 = vunpack.c.l.bf16 %v67
    %v139 = vunpack.c.h.bf16 %v67
    %v140 = vunpack.c.l.bf16 %v68
    %v141 = vunpack.c.h.bf16 %v68
    %v142 = vunpack.c.l.bf16 %v69
    %v143 = vunpack.c.h.bf16 %v69
    %v144 = vunpack.c.l.bf16 %v70
    %v145 = vunpack.c.h.bf16 %v70
    %v146 = vunpack.c.l.bf16 %v71
    %v147 = vunpack.c.h.bf16 %v71
    %v148 = vunpack.c.l.bf16 %v72
    %v149 = vunpack.c.h.bf16 %v72
    %v150 = vunpack.c.l.bf16 %v73
    %v151 = vunpack.c.h.bf16 %v73
    %v152 = vunpack.c.l.bf16 %v74
    %v153 = vunpack.c.h.bf16 %v74
    %v154 = vunpack.c.l.bf16 %v75
    %v155 = vunpack.c.h.bf16 %v75
    %v156 = vunpack.c.l.bf16 %v76
    %v157 = vunpack.c.h.bf16 %v76
    %v158 = vunpack.c.l.bf16 %v77
    %v159 = vunpack.c.h.bf16 %v77
    %v160 = vunpack.c.l.bf16 %v78
    %v161 = vunpack.c.h.bf16 %v78
    %v162 = vunpack.c.l.bf16 %v79
    %v163 = vunpack.c.h.bf16 %v79
    %v164 = vunpack.c.l.bf16 %v80
    %v165 = vunpack.c.h.bf16 %v80
    %v166 = vunpack.c.l.bf16 %v81
    %v167 = vunpack.c.h.bf16 %v81
    %v168 = vunpack.c.l.bf16 %v82
    %v169 = vunpack.c.h.bf16 %v82
    %v170 = vunpack.c.l.bf16 %v83
    %v171 = vunpack.c.h.bf16 %v83
    %v172 = vunpack.c.l.bf16 %v84
    %v173 = vunpack.c.h.bf16 %v84
    %v174 = vunpack.c.l.bf16 %v85
    %v175 = vunpack.c.h.bf16 %v85
    %v176 = vunpack.c.l.bf16 %v86
    %v177 = vunpack.c.h.bf16 %v86
    %v178 = vunpack.c.l.bf16 %v87
    %v179 = vunpack.c.h.bf16 %v87
    %v180 = vunpack.c.l.bf16 %v88
    %v181 = vunpack.c.h.bf16 %v88
    %v182 = vunpack.c.l.bf16 %v89
    %v183 = vunpack.c.h.bf16 %v89
    %v184 = vunpack.c.l.bf16 %v90
    %v185 = vunpack.c.h.bf16 %v90
    %v186 = vunpack.c.l.bf16 %v91
    %v187 = vunpack.c.h.bf16 %v91
    %v188 = vunpack.c.l.bf16 %v92
    %v189 = vunpack.c.h.bf16 %v92
    %v190 = vunpack.c.l.bf16 %v93
    %v191 = vunpack.c.h.bf16 %v93
    %v192 = vunpack.c.l.bf16 %v94
    %v193 = vunpack.c.h.bf16 %v94
    %v194 = vunpack.c.l.bf16 %v95
    %v195 = vunpack.c.h.bf16 %v95
    %v196 = vunpack.c.l.bf16 %v96
    %v197 = vunpack.c.h.bf16 %v96
    %v198 = vunpack.c.l.bf16 %v97
    %v199 = vunpack.c.h.bf16 %v97
    %v200 = vunpack.c.l.bf16 %v98
    %v201 = vunpack.c.h.bf16 %v98
    %v202 = vunpack.c.l.bf16 %v99
    %v203 = vunpack.c.h.bf16 %v99
    %v204 = vunpack.c.l.bf16 %v100
    %v205 = vunpack.c.h.bf16 %v100
    %v206 = vunpack.c.l.bf16 %v101
    %v207 = vunpack.c.h.bf16 %v101
    %v208 = vunpack.c.l.bf16 %v102
    %v209 = vunpack.c.h.bf16 %v102
    %v210 = vunpack.c.l.bf16 %v103
    %v211 = vunpack.c.h.bf16 %v103
    %v212 = vunpack.c.l.bf16 %v104
    %v213 = vunpack.c.h.bf16 %v104
    %v214 = vunpack.c.l.bf16 %v105
    %v215 = vunpack.c.h.bf16 %v105
    %v216 = vunpack.c.l.bf16 %v106
    %v217 = vunpack.c.h.bf16 %v106
    %v218 = vunpack.c.l.bf16 %v107
    %v219 = vunpack.c.h.bf16 %v107
    %v220 = vunpack.c.l.bf16 %v108
    %v221 = vunpack.c.h.bf16 %v108
    %v222 = vunpack.c.l.bf16 %v109
    %v223 = vunpack.c.h.bf16 %v109
    %v224 = vunpack.c.l.bf16 %v110
    %v225 = vunpack.c.h.bf16 %v110
    %v226 = vunpack.c.l.bf16 %v111
    %v227 = vunpack.c.h.bf16 %v111
    %v228 = vunpack.c.l.bf16 %v112
    %v229 = vunpack.c.h.bf16 %v112
    %v230 = vunpack.c.l.bf16 %v113
    %v231 = vunpack.c.h.bf16 %v113
    %v232 = vunpack.c.l.bf16 %v114
    %v233 = vunpack.c.h.bf16 %v114
    %v234 = vunpack.c.l.bf16 %v115
    %v235 = vunpack.c.h.bf16 %v115
    %v236 = vunpack.c.l.bf16 %v116
    %v237 = vunpack.c.h.bf16 %v116
    %v238 = vunpack.c.l.bf16 %v117
    %v239 = vunpack.c.h.bf16 %v117
    %v240 = vunpack.c.l.bf16 %v118
    %v241 = vunpack.c.h.bf16 %v118
    %v242 = vunpack.c.l.bf16 %v119
    %v243 = vunpack.c.h.bf16 %v119
    %v244 = vunpack.c.l.bf16 %v120
    %v245 = vunpack.c.h.bf16 %v120
    %v246 = vunpack.c.l.bf16 %v121
    %v247 = vunpack.c.h.bf16 %v121
    %v248 = vunpack.c.l.bf16 %v122
    %v249 = vunpack.c.h.bf16 %v122
    %v250 = vunpack.c.l.bf16 %v123
    %v251 = vunpack.c.h.bf16 %v123
    %v252 = vld [vmem:[%s3] sm:$0xf]
    %v254 = vlaneseq
    %v255 = vshrl.u32 %v254, 7
    %v256 = vsub.s32 0, %v255
    %v257 = vrot.slane %v252, %v256
    %v258 = vlaneseq
    %v259 = vshrl.u32 %v258, 7
    %v260 = vsub.s32 1, %v259
    %v261 = vrot.slane %v252, %v260
    %v262 = vlaneseq
    %v263 = vshrl.u32 %v262, 7
    %v264 = vsub.s32 2, %v263
    %v265 = vrot.slane %v252, %v264
    %v266 = vlaneseq
    %v267 = vshrl.u32 %v266, 7
    %v268 = vsub.s32 3, %v267
    %v269 = vrot.slane %v252, %v268
    %274 = vmatprep.subr.mxu0 %v125
    %275 = vmatpush1.msra.mxu0 %v124
    %276 = vmatprep.subr.mxu0 %v129
    %277 = vmatpush1.msra.mxu0 %v128
    %278 = vmatprep.subr.mxu0 %v133
    %279 = vmatpush1.msra.mxu0 %v132
    %280 = vmatprep.subr.mxu0 %v137
    %281 = vmatpush1.msra.mxu0 %v136
    %282 = vmatprep.subr.mxu0 %v141
    %283 = vmatpush1.msra.mxu0 %v140
    %284 = vmatprep.subr.mxu0 %v145
    %285 = vmatpush1.msra.mxu0 %v144
    %286 = vmatprep.subr.mxu0 %v149
    %287 = vmatpush1.msra.mxu0 %v148
    %288 = vmatprep.subr.mxu0 %v153
    %289 = vmatpush1.msra.mxu0 %v152
    %290 = vmatprep.subr.mxu0 %v157
    %291 = vmatpush1.msra.mxu0 %v156
    %292 = vmatprep.subr.mxu0 %v161
    %293 = vmatpush1.msra.mxu0 %v160
    %294 = vmatprep.subr.mxu0 %v165
    %295 = vmatpush1.msra.mxu0 %v164
    %296 = vmatprep.subr.mxu0 %v169
    %297 = vmatpush1.msra.mxu0 %v168
    %298 = vmatprep.subr.mxu0 %v173
    %299 = vmatpush1.msra.mxu0 %v172
    %300 = vmatprep.subr.mxu0 %v177
    %301 = vmatpush1.msra.mxu0 %v176
    %302 = vmatprep.subr.mxu0 %v181
    %303 = vmatpush1.msra.mxu0 %v180
    %304 = vmatprep.subr.mxu0 %v185
    %305 = vmatpush1.msra.mxu0 %v184
    %306 = vmatprep.subr.mxu0 %v189
    %307 = vmatpush1.msra.mxu0 %v188
    %308 = vmatprep.subr.mxu0 %v193
    %309 = vmatpush1.msra.mxu0 %v192
    %310 = vmatprep.subr.mxu0 %v197
    %311 = vmatpush1.msra.mxu0 %v196
    %312 = vmatprep.subr.mxu0 %v201
    %313 = vmatpush1.msra.mxu0 %v200
    %314 = vmatprep.subr.mxu0 %v205
    %315 = vmatpush1.msra.mxu0 %v204
    %316 = vmatprep.subr.mxu0 %v209
    %317 = vmatpush1.msra.mxu0 %v208
    %318 = vmatprep.subr.mxu0 %v213
    %319 = vmatpush1.msra.mxu0 %v212
    %320 = vmatprep.subr.mxu0 %v217
    %321 = vmatpush1.msra.mxu0 %v216
    %322 = vmatprep.subr.mxu0 %v221
    %323 = vmatpush1.msra.mxu0 %v220
    %324 = vmatprep.subr.mxu0 %v225
    %325 = vmatpush1.msra.mxu0 %v224
    %326 = vmatprep.subr.mxu0 %v229
    %327 = vmatpush1.msra.mxu0 %v228
    %328 = vmatprep.subr.mxu0 %v233
    %329 = vmatpush1.msra.mxu0 %v232
    %330 = vmatprep.subr.mxu0 %v237
    %331 = vmatpush1.msra.mxu0 %v236
    %332 = vmatprep.subr.mxu0 %v241
    %333 = vmatpush1.msra.mxu0 %v240
    %334 = vmatprep.subr.mxu0 %v245
    %335 = vmatpush1.msra.mxu0 %v244
    %336 = vmatprep.subr.mxu0 %v249
    %337 = vmatpush1.msra.mxu0 %v248
    %338 = vmatprep.mubr.f32.mxu0 %v59
    %339 = vmatmul.mubr.f32.gmra.mrb[0].mxu0 %v58
    %v340 = vpop.f32.mrb[0].mxu0
    %v341 = vadd.f32 %v257, %v340
    %v342 = vpop.f32.mrb[0].mxu0
    %v343 = vadd.f32 %v261, %v342
    %344 = vdwg.mxu0
    %345 = vmatprep.subr.mxu0 %v127
    %346 = vmatpush1.msra.mxu0 %v126
    %347 = vmatprep.subr.mxu0 %v131
    %348 = vmatpush1.msra.mxu0 %v130
    %349 = vmatprep.subr.mxu0 %v135
    %350 = vmatpush1.msra.mxu0 %v134
    %351 = vmatprep.subr.mxu0 %v139
    %352 = vmatpush1.msra.mxu0 %v138
    %353 = vmatprep.subr.mxu0 %v143
    %354 = vmatpush1.msra.mxu0 %v142
    %355 = vmatprep.subr.mxu0 %v147
    %356 = vmatpush1.msra.mxu0 %v146
    %357 = vmatprep.subr.mxu0 %v151
    %358 = vmatpush1.msra.mxu0 %v150
    %359 = vmatprep.subr.mxu0 %v155
    %360 = vmatpush1.msra.mxu0 %v154
    %361 = vmatprep.subr.mxu0 %v159
    %362 = vmatpush1.msra.mxu0 %v158
    %363 = vmatprep.subr.mxu0 %v163
    %364 = vmatpush1.msra.mxu0 %v162
    %365 = vmatprep.subr.mxu0 %v167
    %366 = vmatpush1.msra.mxu0 %v166
    %367 = vmatprep.subr.mxu0 %v171
    %368 = vmatpush1.msra.mxu0 %v170
    %369 = vmatprep.subr.mxu0 %v175
    %370 = vmatpush1.msra.mxu0 %v174
    %371 = vmatprep.subr.mxu0 %v179
    %372 = vmatpush1.msra.mxu0 %v178
    %373 = vmatprep.subr.mxu0 %v183
    %374 = vmatpush1.msra.mxu0 %v182
    %375 = vmatprep.subr.mxu0 %v187
    %376 = vmatpush1.msra.mxu0 %v186
    %377 = vmatprep.subr.mxu0 %v191
    %378 = vmatpush1.msra.mxu0 %v190
    %379 = vmatprep.subr.mxu0 %v195
    %380 = vmatpush1.msra.mxu0 %v194
    %381 = vmatprep.subr.mxu0 %v199
    %382 = vmatpush1.msra.mxu0 %v198
    %383 = vmatprep.subr.mxu0 %v203
    %384 = vmatpush1.msra.mxu0 %v202
    %385 = vmatprep.subr.mxu0 %v207
    %386 = vmatpush1.msra.mxu0 %v206
    %387 = vmatprep.subr.mxu0 %v211
    %388 = vmatpush1.msra.mxu0 %v210
    %389 = vmatprep.subr.mxu0 %v215
    %390 = vmatpush1.msra.mxu0 %v214
    %391 = vmatprep.subr.mxu0 %v219
    %392 = vmatpush1.msra.mxu0 %v218
    %393 = vmatprep.subr.mxu0 %v223
    %394 = vmatpush1.msra.mxu0 %v222
    %395 = vmatprep.subr.mxu0 %v227
    %396 = vmatpush1.msra.mxu0 %v226
    %397 = vmatprep.subr.mxu0 %v231
    %398 = vmatpush1.msra.mxu0 %v230
    %399 = vmatprep.subr.mxu0 %v235
    %400 = vmatpush1.msra.mxu0 %v234
    %401 = vmatprep.subr.mxu0 %v239
    %402 = vmatpush1.msra.mxu0 %v238
    %403 = vmatprep.subr.mxu0 %v243
    %404 = vmatpush1.msra.mxu0 %v242
    %405 = vmatprep.subr.mxu0 %v247
    %406 = vmatpush1.msra.mxu0 %v246
    %407 = vmatprep.subr.mxu0 %v251
    %408 = vmatpush1.msra.mxu0 %v250
    %409 = vmatprep.mubr.f32.mxu0 %v59
    %410 = vmatmul.mubr.f32.gmra.mrb[0].mxu0 %v58
    %v411 = vpop.f32.mrb[0].mxu0
    %v412 = vadd.f32 %v265, %v411
    %v413 = vpop.f32.mrb[0].mxu0
    %v414 = vadd.f32 %v269, %v413
    %415 = vdwg.mxu0
    %v416 = vxor.u32 %v341, 2147483648
    %v417 = vmul.f32 %v416, 1.442695
    %v418 = vpow.pop %v417
    %v419 = vadd.f32 %v418, 1.0
    %v420 = vrcp.pop %v419
    %v421 = vmul.f32 1.0, %v420
    %v422 = vxor.u32 %v343, 2147483648
    %v423 = vmul.f32 %v422, 1.442695
    %v424 = vpow.pop %v423
    %v425 = vadd.f32 %v424, 1.0
    %v426 = vrcp.pop %v425
    %v427 = vmul.f32 1.0, %v426
    %v428 = vtanh.pop %v412
    %v429 = vxor.u32 %v414, 2147483648
    %v430 = vmul.f32 %v429, 1.442695
    %v431 = vpow.pop %v430
    %v432 = vadd.f32 %v431, 1.0
    %v433 = vrcp.pop %v432
    %v434 = vmul.f32 1.0, %v433
    %v435 = vld [vmem:[#allocation5] sm:$0xff]
    %v436 = vmul.f32 %v427, %v435
    %v437 = vmul.f32 %v421, %v428
    %v438 = vadd.f32 %v436, %v437
    %v439 = vtanh.pop %v438
    %v440 = vmul.f32 %v434, %v439
    %441 = vst [vmem:[#allocation8] sm:$0xff] %v440
    %442 = vst [vmem:[#allocation9] sm:$0xff] %v438
    // Predicated region
    $region30: #{tpu_custom_call.1} parent=1 // pred_check
      _
    $region31: #{tpu_custom_call.1} parent=1 // pred_check_branch
      %444 = sbr.rel (0) target = $region33
    $region32: #{tpu_custom_call.1} parent=1 // pred_region
      %s446 = ssub.s32 128, 128
      %447 = vsyncadd [#allocation4], %s446
      %s449 = sshll.u32 [#allocation8], 4
      %s450 = int_to_ptr.vmem [resolvable:$true] %s449
      %452 = dma.vmem_to_hbm [thread:$0]  %s450, 128, %s4, [#allocation4]
    $region33: #{tpu_custom_call.1} parent=1 // pred_fallthru
      _
    // Predicated region
    $region34: #{tpu_custom_call.1} parent=1 // pred_check
      _
    $region35: #{tpu_custom_call.1} parent=1 // pred_check_branch
      %454 = sbr.rel (0) target = $region37
    $region36: #{tpu_custom_call.1} parent=1 // pred_region
      %s456 = ssub.s32 128, 128
      %457 = vsyncadd [#allocation10], %s456
      %s459 = sshll.u32 [#allocation9], 4
      %s460 = int_to_ptr.vmem [resolvable:$true] %s459
      %462 = dma.vmem_to_hbm [thread:$0]  %s460, 128, %s5, [#allocation10]
    $region37: #{tpu_custom_call.1} parent=1 // pred_fallthru
      _
    // Predicated region
    $region38: #{tpu_custom_call.1} parent=1 // pred_check
      _
    $region39: #{tpu_custom_call.1} parent=1 // pred_check_branch
      %464 = sbr.rel (0) target = $region41
    $region40: #{tpu_custom_call.1} parent=1 // pred_region
      %465 = dma.done [#allocation4], 128
    $region41: #{tpu_custom_call.1} parent=1 // pred_fallthru
      _
    // Predicated region
    $region42: #{tpu_custom_call.1} parent=1 // pred_check
      _
    $region43: #{tpu_custom_call.1} parent=1 // pred_check_branch
      %467 = sbr.rel (0) target = $region45
    $region44: #{tpu_custom_call.1} parent=1 // pred_region
      %468 = dma.done [#allocation10], 128
    $region45: #{tpu_custom_call.1} parent=1 // pred_fallthru
      _
    %469 = vsyncpa [#allocation3], 1
    %470 = vsyncpa [#allocation6], 1
    %471 = vsyncpa [#allocation4], 1
    %472 = vsyncpa [#allocation10], 1

</llo_original>
